<compile_context>
chip_gen: v6e
topology: v6e:2x2x1
jax: 0.10.0
libtpu: 0.0.40
codegen_flags: <defaults>
</compile_context>

<pallas_src>
import jax
import jax.numpy as jnp
from jax.experimental import pallas as pl
from jax.experimental.pallas import tpu as pltpu


def _reduce_sum_tail(v):
    # Sum over all per-group axes (everything after the leading (Bt, G)),
    # one axis at a time (lane reduce, then sublane reduce) to stay on
    # well-trodden XLU lowering paths.
    for ax in range(v.ndim - 1, 1, -1):
        v = jnp.sum(v, axis=ax, keepdims=True)
    return v


def _make_groupnorm_kernel(eps: float, n: int):
    inv_n = 1.0 / n
    inv_nm1 = 1.0 / (n - 1)

    def groupnorm_kernel(x_ref, gamma_ref, beta_ref, o_ref):
        # x_ref / o_ref: (Bt, G, Cg, HW) on the main path,
        #                (Bt, G, Cg*HW)  on the small-spatial fallback path.
        # gamma_ref/beta_ref broadcast against them ((1, G, Cg, 1) resp.
        # (1, G, Cg*HW)), resident in VMEM (constant index_map).
        x = x_ref[...].astype(jnp.float32)

        # Two-pass stats: mean, then centered sum of squares (unbiased, N-1).
        mean = _reduce_sum_tail(x) * inv_n                 # (Bt, G, 1[,1])
        xc = x - mean
        var = _reduce_sum_tail(xc * xc) * inv_nm1          # (Bt, G, 1[,1])
        inv = 1.0 / (jnp.sqrt(var) + eps)                  # tiny sliver; exact

        # Fold the affine into per-(group, channel) scalars: one mul + one add
        # per element, broadcast along the lane (spatial) axis.
        a = gamma_ref[...].astype(jnp.float32) * inv
        b = beta_ref[...].astype(jnp.float32)
        o_ref[...] = (xc * a + b).astype(o_ref.dtype)

    return groupnorm_kernel


def _vmem_budget_bytes() -> int:
    """~75% of this chip's physical VMEM (portable v5e / v6e / v7x sizing)."""
    try:
        cap = int(pltpu.get_tpu_info().vmem_capacity_bytes)
    except Exception:
        cap = 64 << 20  # conservative fallback (v7x per-core VMEM)
    return (cap * 3) // 4


def _largest_divisor_leq(n: int, cap: int) -> int:
    cap = max(1, min(n, cap))
    for d in range(cap, 0, -1):
        if n % d == 0:
            return d
    return 1


def group_norm(x, gamma, beta, group_num=16, eps=1e-10):
    """x: (B, C, H, W) NCHW; gamma, beta: (C, 1, 1). Returns (B, C, H, W)."""
    B, C, H, W = x.shape
    assert C % group_num == 0, "channels must be divisible by group_num"
    Cg = C // group_num
    HW = H * W
    n = Cg * HW
    assert n > 1, "group size must be > 1 for unbiased std (N-1)"
    itemsize = jnp.dtype(x.dtype).itemsize

    # ---- layout selection --------------------------------------------------
    # Main path (HW >= 128): keep the spatial axis as the lane axis so
    # gamma/beta stay compact ((1, G, Cg, 1)) and broadcast along lanes.
    # Fallback (HW < 128): flatten each group to one lane-dense (Cg*HW) row
    # and expand gamma/beta (tiny in that regime).
    use_4d = HW >= 128
    if use_4d:
        x_r = x.reshape(B, group_num, Cg, HW)
        gamma_r = gamma.reshape(1, group_num, Cg, 1)
        beta_r = beta.reshape(1, group_num, Cg, 1)
    else:
        CgHW = Cg * HW
        x_r = x.reshape(B, group_num, CgHW)
        gamma_r = jnp.broadcast_to(
            gamma.reshape(group_num, Cg, 1), (group_num, Cg, HW)
        ).reshape(1, group_num, CgHW)
        beta_r = jnp.broadcast_to(
            beta.reshape(group_num, Cg, 1), (group_num, Cg, HW)
        ).reshape(1, group_num, CgHW)

    elem_shape = x_r.shape[1:]  # per-batch-element block shape
    ndim = 1 + len(elem_shape)

    # ---- block coarsening (HBM-bound => ~0.5-2 MiB blocks) ------------------
    budget = _vmem_budget_bytes()
    target_block_bytes = min(2 << 20, budget // 8)
    per_elem_bytes = group_num * n * itemsize
    bt_by_size = max(1, target_block_bytes // per_elem_bytes)
    # Keep >= 2 grid steps so v7x's two TensorCores both get work.
    bt_cap = min(bt_by_size, B // 2) if B >= 2 else 1
    Bt = _largest_divisor_leq(B, bt_cap)
    # TODO(synk): when a single batch element exceeds ~budget/6 (very large
    # Cg*HW), add a second 'arbitrary' grid axis over Cg*HW chunks with a
    # (G, 1) stats scratch (chunked two-pass) so v7x's 64 MiB VMEM still fits.

    grid = (B // Bt,)
    x_block = (Bt,) + elem_shape
    x_idx = lambda bidx: (bidx,) + (0,) * (ndim - 1)
    p_idx = lambda bidx: (0,) * ndim

    kernel = _make_groupnorm_kernel(eps, n)

    cost = pl.CostEstimate(
        flops=8 * B * C * H * W,
        transcendentals=B * group_num,
        bytes_accessed=2 * B * C * H * W * itemsize + 2 * C * 4,
    )

    out = pl.pallas_call(
        kernel,
        out_shape=jax.ShapeDtypeStruct(x_r.shape, x.dtype),
        grid_spec=pltpu.PrefetchScalarGridSpec(
            num_scalar_prefetch=0,
            grid=grid,
            in_specs=[
                pl.BlockSpec(x_block, x_idx),
                # constant index_map -> DMA'd once, stays resident in VMEM
                # (still double-buffered by the pipeline; counted in budget)
                pl.BlockSpec(gamma_r.shape, p_idx),
                pl.BlockSpec(beta_r.shape, p_idx),
            ],
            out_specs=pl.BlockSpec(x_block, x_idx),
        ),
        compiler_params=pltpu.CompilerParams(
            dimension_semantics=("parallel",),
            vmem_limit_bytes=budget,
        ),
        cost_estimate=cost,
    )(x_r, gamma_r, beta_r)

    return out.reshape(B, C, H, W)


def group_norm_ref(x, gamma, beta, group_num=16, eps=1e-10):
    """Pure-JAX reference mirroring the PyTorch forward exactly."""
    B, C, H, W = x.shape
    xr = x.reshape(B, group_num, -1)
    mean = xr.mean(axis=2, keepdims=True)
    std = jnp.sqrt(xr.var(axis=2, keepdims=True, ddof=1))
    xr = (xr - mean) / (std + eps)
    return xr.reshape(B, C, H, W) * gamma + beta


if __name__ == "__main__":
    key = jax.random.PRNGKey(0)
    kx1, kx2, kg1, kb1, kg2, kb2 = jax.random.split(key, 6)

    # Case 1: module defaults (group_num=16), small spatial (HW=64 < 128)
    # -> exercises the flattened lane-dense fallback path.
    B1, C1, H1, W1, G1 = 2, 32, 8, 8, 16
    x1 = jax.random.normal(kx1, (B1, C1, H1, W1), dtype=jnp.float32) + 0.5
    gamma1 = jnp.ones((C1, 1, 1), dtype=jnp.float32)   # nn.Parameter(ones)
    beta1 = jnp.zeros((C1, 1, 1), dtype=jnp.float32)   # nn.Parameter(zeros)
    out1 = jax.block_until_ready(group_norm(x1, gamma1, beta1, G1))
    ref1 = group_norm_ref(x1, gamma1, beta1, G1)
    assert out1.shape == (B1, C1, H1, W1)
    assert jnp.allclose(out1, ref1, atol=1e-5, rtol=1e-5), "mismatch (case 1)"

    # Case 1b: same shapes, random affine (checks channel->group mapping on
    # the fallback path).
    gamma1b = jax.random.normal(kg1, (C1, 1, 1), dtype=jnp.float32)
    beta1b = jax.random.normal(kb1, (C1, 1, 1), dtype=jnp.float32)
    out1b = jax.block_until_ready(group_norm(x1, gamma1b, beta1b, G1))
    ref1b = group_norm_ref(x1, gamma1b, beta1b, G1)
    assert jnp.allclose(out1b, ref1b, atol=1e-5, rtol=1e-5), "mismatch (case 1b)"

    # Case 2: HW=256 >= 128 -> exercises the main compact-param 4-D path with
    # batch coarsening (Bt=2, grid=(2,)) and random affine params.
    B2, C2, H2, W2, G2 = 4, 8, 16, 16, 4
    x2 = 2.0 * jax.random.normal(kx2, (B2, C2, H2, W2), dtype=jnp.float32) - 1.0
    gamma2 = jax.random.normal(kg2, (C2, 1, 1), dtype=jnp.float32)
    beta2 = jax.random.normal(kb2, (C2, 1, 1), dtype=jnp.float32)
    out2 = jax.block_until_ready(group_norm(x2, gamma2, beta2, G2))
    ref2 = group_norm_ref(x2, gamma2, beta2, G2)
    assert out2.shape == (B2, C2, H2, W2)
    assert jnp.allclose(out2, ref2, atol=1e-5, rtol=1e-5), "mismatch (case 2)"

    print("KERNEL_OK")
</pallas_src>

<mosaic_0001>
module attributes {stable_mosaic.version = 11 : i64} {
  func.func @groupnorm_kernel(%arg0: i32, %arg1: memref<1x16x128xf32, #tpu.memory_space<vmem>>, %arg2: memref<1x16x128xf32, #tpu.memory_space<vmem>>, %arg3: memref<1x16x128xf32, #tpu.memory_space<vmem>>, %arg4: memref<1x16x128xf32, #tpu.memory_space<vmem>>) attributes {dimension_semantics = [#tpu.dimension_semantics<parallel>], iteration_bounds = array<i64: 2>, scalar_prefetch = 0 : i64, scratch_operands = 0 : i64, tpu.core_type = #tpu.core_type<tc>, window_params = [{transform_indices = @transform_0, window_bounds = array<i64: 1, 16, 128>}, {pipeline_mode = #tpu.pipeline_mode<synchronous>, transform_indices = @transform_1, window_bounds = array<i64: 1, 16, 128>}, {pipeline_mode = #tpu.pipeline_mode<synchronous>, transform_indices = @transform_2, window_bounds = array<i64: 1, 16, 128>}, {transform_indices = @transform_3, window_bounds = array<i64: 1, 16, 128>}]} {
    %c0 = arith.constant 0 : index
    %c0_0 = arith.constant 0 : index
    %c0_1 = arith.constant 0 : index
    %0 = vector.load %arg1[%c0, %c0_0, %c0_1] : memref<1x16x128xf32, #tpu.memory_space<vmem>>, vector<1x16x128xf32>
    %cst = arith.constant dense<0.000000e+00> : vector<1x16xf32>
    %1 = vector.multi_reduction <add>, %0, %cst [2] : vector<1x16x128xf32> to vector<1x16xf32>
    %2 = vector.shape_cast %1 : vector<1x16xf32> to vector<1x16x1xf32>
    %cst_2 = arith.constant 7.812500e-03 : f32
    %3 = vector.broadcast %cst_2 : f32 to vector<1x16x1xf32>
    %4 = arith.mulf %2, %3 : vector<1x16x1xf32>
    %5 = vector.broadcast %4 : vector<1x16x1xf32> to vector<1x16x128xf32>
    %6 = arith.subf %0, %5 : vector<1x16x128xf32>
    %7 = arith.mulf %6, %6 : vector<1x16x128xf32>
    %cst_3 = arith.constant dense<0.000000e+00> : vector<1x16xf32>
    %8 = vector.multi_reduction <add>, %7, %cst_3 [2] : vector<1x16x128xf32> to vector<1x16xf32>
    %9 = vector.shape_cast %8 : vector<1x16xf32> to vector<1x16x1xf32>
    %cst_4 = arith.constant 0.00787401571 : f32
    %10 = vector.broadcast %cst_4 : f32 to vector<1x16x1xf32>
    %11 = arith.mulf %9, %10 : vector<1x16x1xf32>
    %12 = math.sqrt %11 : vector<1x16x1xf32>
    %cst_5 = arith.constant 1.000000e-10 : f32
    %13 = vector.broadcast %cst_5 : f32 to vector<1x16x1xf32>
    %14 = arith.addf %12, %13 : vector<1x16x1xf32>
    %cst_6 = arith.constant 1.000000e+00 : f32
    %15 = vector.broadcast %cst_6 : f32 to vector<1x16x1xf32>
    %16 = arith.divf %15, %14 : vector<1x16x1xf32>
    %c0_7 = arith.constant 0 : index
    %c0_8 = arith.constant 0 : index
    %c0_9 = arith.constant 0 : index
    %17 = vector.load %arg2[%c0_7, %c0_8, %c0_9] : memref<1x16x128xf32, #tpu.memory_space<vmem>>, vector<1x16x128xf32>
    %18 = vector.broadcast %16 : vector<1x16x1xf32> to vector<1x16x128xf32>
    %19 = arith.mulf %17, %18 : vector<1x16x128xf32>
    %c0_10 = arith.constant 0 : index
    %c0_11 = arith.constant 0 : index
    %c0_12 = arith.constant 0 : index
    %20 = vector.load %arg3[%c0_10, %c0_11, %c0_12] : memref<1x16x128xf32, #tpu.memory_space<vmem>>, vector<1x16x128xf32>
    %21 = arith.mulf %6, %19 : vector<1x16x128xf32>
    %22 = arith.addf %21, %20 : vector<1x16x128xf32>
    %c0_13 = arith.constant 0 : index
    %c0_14 = arith.constant 0 : index
    %c0_15 = arith.constant 0 : index
    %23 = vector.load %arg4[%c0_13, %c0_14, %c0_15] : memref<1x16x128xf32, #tpu.memory_space<vmem>>, vector<1x16x128xf32>
    tpu.vector_store %arg4[%c0_13, %c0_14, %c0_15], %22 {strides = array<i32>} : memref<1x16x128xf32, #tpu.memory_space<vmem>>, vector<1x16x128xf32>,
    return
  }
  func.func @transform_0(%arg0: i32) -> (i32, i32, i32) {
    %c0_i32 = arith.constant 0 : i32
    %c0_i32_0 = arith.constant 0 : i32
    %c0_i32_1 = arith.constant 0 : i32
    return %arg0, %c0_i32, %c0_i32_0 : i32, i32, i32
  }
  func.func @transform_1(%arg0: i32) -> (i32, i32, i32) {
    %c0_i32 = arith.constant 0 : i32
    %c0_i32_0 = arith.constant 0 : i32
    %c0_i32_1 = arith.constant 0 : i32
    %c0_i32_2 = arith.constant 0 : i32
    return %c0_i32, %c0_i32_0, %c0_i32_1 : i32, i32, i32
  }
  func.func @transform_2(%arg0: i32) -> (i32, i32, i32) {
    %c0_i32 = arith.constant 0 : i32
    %c0_i32_0 = arith.constant 0 : i32
    %c0_i32_1 = arith.constant 0 : i32
    %c0_i32_2 = arith.constant 0 : i32
    return %c0_i32, %c0_i32_0, %c0_i32_1 : i32, i32, i32
  }
  func.func @transform_3(%arg0: i32) -> (i32, i32, i32) {
    %c0_i32 = arith.constant 0 : i32
    %c0_i32_0 = arith.constant 0 : i32
    %c0_i32_1 = arith.constant 0 : i32
    return %arg0, %c0_i32, %c0_i32_0 : i32, i32, i32
  }
}

</mosaic_0001>

<llo_original>
// kernel: tpu_custom_call.1
$region0: #{tpu_custom_call.1}
  #allocation0 [shape = 'u32[]', space=smem, size = 0x4, offset = 0x4, fixed_abs, tag = 'smem constant byte address 0x4 - core index']
  #allocation1 [shape = 'u32[144,128]{1,0:T(1,128)}', space=vmem, size = 0x12000, scoped, tag = 'internal scratch']
  %s0 = inlined_call_operand.hbm [shape: f32[2,16,128], index: 0, kind: input, shape index: {}]
  %s1 = inlined_call_operand.hbm [shape: f32[1,16,128], index: 1, kind: input, shape index: {}]
  %s2 = inlined_call_operand.hbm [shape: f32[1,16,128], index: 2, kind: input, shape index: {}]
  %s3 = inlined_call_operand.hbm [shape: f32[2,16,128], index: 3, kind: output, shape index: {}]
  %s4 = sld [smem:[#allocation0]]
  $region57: #{tpu_custom_call.1} parent=0
    _
  %s6 = ssub.s32 1, %s4
  %s7 = scalar_select 0, %s6, %s4
  $region1: #{tpu_custom_call.1} parent=0
    #allocation2 [shape = 'u8[16384]{0}', space=vmem, size = 0x4000, scoped, tag = 'input window, operand 0']
    #allocation3 [shape = 's32[2]{0}', space=sflag, size = 0x8, scoped, tag = 'scoped memory for tpu_custom_call.1']
    #allocation4 [shape = 's32[2]{0}', space=sflag, size = 0x8, scoped, tag = 'scoped memory for tpu_custom_call.1']
    #allocation5 [shape = 'u8[8192]{0}', space=vmem, size = 0x2000, scoped, tag = 'input window, operand 1, single buffered']
    #allocation6 [shape = 's32[1]{0}', space=sflag, size = 0x4, scoped, tag = 'scoped memory for tpu_custom_call.1']
    #allocation7 [shape = 'u8[8192]{0}', space=vmem, size = 0x2000, scoped, tag = 'input window, operand 2, single buffered']
    #allocation8 [shape = 'u8[16384]{0}', space=vmem, size = 0x4000, scoped, tag = 'output window, operand 0']
    %8 = vsyncpa [#allocation3], 0
    %s9 = scalar_lea.sflag [#allocation3], 1
    %10 = vsyncpa %s9, 0
    %11 = vsyncpa [#allocation6], 0
    %12 = vsyncpa [#allocation4], 0
    %s13 = scalar_lea.sflag [#allocation4], 1
    %14 = vsyncpa %s13, 0
    loop: start=0, step=1, limit=4
    $region2: #{tpu_custom_call.1} parent=1 // loop_pre_header
      _
    $region3: #{tpu_custom_call.1} parent=1 // loop_header
      %s16 = sphi 0, %s20
      %p17 = scmp.ge.s32.totalorder %s16, 4
      %s26 = sphi 0, %s28
      %s29 = sphi 0, %s26
      %s30 = sphi 0, %s29
      %s46 = sphi 0, %s30
      %s50 = sphi 0, %s50
      %s52 = sphi 0, %s50
      %s53 = sphi 0, %s52
      %s67 = sphi 0, %s53
      %s71 = sphi 0, %s71
      %s73 = sphi 0, %s71
      %s74 = sphi 0, %s73
      %s88 = sphi 0, %s74
      %s94 = sphi 0, %s96
      %s97 = sphi 0, %s94
      %s98 = sphi 0, %s97
      %s114 = sphi 0, %s98
    $region4: #{tpu_custom_call.1} parent=1 // loop_header_branch
      %19 = sbr.rel (%p17) target = $region8
    $region5: #{tpu_custom_call.1} parent=1 // loop_body
      %s21 = ssub.s32 %s16, 1
      %s22 = ssub.s32 %s16, 2
      %s23 = sadd.s32 %s16, 1
      %s24 = ssub.s32 %s16, %s23
      %p25 = scmp.eq.s32.totalorder %s24, 0
      %s27 = sadd.s32 %s26, 1
      %s28 = scalar_select %p25, %s26, %s27
      %p31 = pneg %p25
      %p32 = scmp.eq.s32.totalorder %s16, 1
      %p33 = por %p31, %p32
      %p34 = scmp.ne.s32.totalorder %s26, %s29
      %p35 = scmp.eq.s32.totalorder %s16, 0
      %p36 = por %p34, %p35
      %p37 = scmp.ne.s32.totalorder %s26, %s29
      %p38 = scmp.eq.s32.totalorder %s21, 1
      %p39 = por %p37, %p38
      %p40 = scmp.ne.s32.totalorder %s29, %s30
      %p41 = scmp.eq.s32.totalorder %s21, 0
      %p42 = por %p40, %p41
      %p43 = scmp.ne.s32.totalorder %s29, %s30
      %p44 = scmp.eq.s32.totalorder %s22, 1
      %p45 = por %p43, %p44
      %p47 = scmp.ne.s32.totalorder %s30, %s46
      %p48 = scmp.eq.s32.totalorder %s22, 0
      %p49 = por %p47, %p48
      %s51 = sadd.s32 %s50, 1
      %p54 = scmp.eq.s32.totalorder %s16, 1
      %p55 = scmp.ne.s32.totalorder %s50, %s52
      %p56 = scmp.eq.s32.totalorder %s16, 0
      %p57 = por %p55, %p56
      %p58 = scmp.ne.s32.totalorder %s50, %s52
      %p59 = scmp.eq.s32.totalorder %s21, 1
      %p60 = por %p58, %p59
      %p61 = scmp.ne.s32.totalorder %s52, %s53
      %p62 = scmp.eq.s32.totalorder %s21, 0
      %p63 = por %p61, %p62
      %p64 = scmp.ne.s32.totalorder %s52, %s53
      %p65 = scmp.eq.s32.totalorder %s22, 1
      %p66 = por %p64, %p65
      %p68 = scmp.ne.s32.totalorder %s53, %s67
      %p69 = scmp.eq.s32.totalorder %s22, 0
      %p70 = por %p68, %p69
      %s72 = sadd.s32 %s71, 1
      %p75 = scmp.eq.s32.totalorder %s16, 1
      %p76 = scmp.ne.s32.totalorder %s71, %s73
      %p77 = scmp.eq.s32.totalorder %s16, 0
      %p78 = por %p76, %p77
      %p79 = scmp.ne.s32.totalorder %s71, %s73
      %p80 = scmp.eq.s32.totalorder %s21, 1
      %p81 = por %p79, %p80
      %p82 = scmp.ne.s32.totalorder %s73, %s74
      %p83 = scmp.eq.s32.totalorder %s21, 0
      %p84 = por %p82, %p83
      %p85 = scmp.ne.s32.totalorder %s73, %s74
      %p86 = scmp.eq.s32.totalorder %s22, 1
      %p87 = por %p85, %p86
      %p89 = scmp.ne.s32.totalorder %s74, %s88
      %p90 = scmp.eq.s32.totalorder %s22, 0
      %p91 = por %p89, %p90
      %s92 = ssub.s32 %s16, %s23
      %p93 = scmp.eq.s32.totalorder %s92, 0
      %s95 = sadd.s32 %s94, 1
      %s96 = scalar_select %p93, %s94, %s95
      %p99 = pneg %p93
      %p100 = scmp.eq.s32.totalorder %s16, 1
      %p101 = por %p99, %p100
      %p102 = scmp.ne.s32.totalorder %s94, %s97
      %p103 = scmp.eq.s32.totalorder %s16, 0
      %p104 = por %p102, %p103
      %p105 = scmp.ne.s32.totalorder %s94, %s97
      %p106 = scmp.eq.s32.totalorder %s21, 1
      %p107 = por %p105, %p106
      %p108 = scmp.ne.s32.totalorder %s97, %s98
      %p109 = scmp.eq.s32.totalorder %s21, 0
      %p110 = por %p108, %p109
      %p111 = scmp.ne.s32.totalorder %s97, %s98
      %p112 = scmp.eq.s32.totalorder %s22, 1
      %p113 = por %p111, %p112
      %p115 = scmp.ne.s32.totalorder %s98, %s114
      %p116 = scmp.eq.s32.totalorder %s22, 0
      %p117 = por %p115, %p116
      %p118 = scmp.le.s32.totalorder 1, %s16
      %p119 = scmp.lt.s32.totalorder %s16, 3
      %p120 = pnand %p118, %p119
      %p121 = pneg %p120
      // Predicated region
      $region9: #{tpu_custom_call.1} parent=5 // pred_check
        _
      $region10: #{tpu_custom_call.1} parent=5 // pred_check_branch
        %123 = sbr.rel (%p120) target = $region12
      $region11: #{tpu_custom_call.1} parent=5 // pred_region
        %s124 = ssub.s32 %s16, 1
        // Predicated region
        $region13: #{tpu_custom_call.1} parent=11 // pred_check
          %p125 = pneg %p63
        $region14: #{tpu_custom_call.1} parent=11 // pred_check_branch
          %127 = sbr.rel (%p125) target = $region16
        $region15: #{tpu_custom_call.1} parent=11 // pred_region
          %s129 = ssub.s32 256, 256
          %130 = vsyncadd [#allocation6], %s129
          %s131 = sshll.u32 [#allocation5], 4
          %s132 = int_to_ptr.vmem [resolvable:$true] %s131
          %137 = dma.hbm_to_vmem [thread:$0]  %s1, 256, %s132, [#allocation6], 128, 128, 8
        $region16: #{tpu_custom_call.1} parent=11 // pred_fallthru
          _
        // Predicated region
        $region17: #{tpu_custom_call.1} parent=11 // pred_check
          %p138 = pneg %p84
        $region18: #{tpu_custom_call.1} parent=11 // pred_check_branch
          %140 = sbr.rel (%p138) target = $region20
        $region19: #{tpu_custom_call.1} parent=11 // pred_region
          %s142 = ssub.s32 256, 256
          %143 = vsyncadd [#allocation6], %s142
          %s144 = sshll.u32 [#allocation7], 4
          %s145 = int_to_ptr.vmem [resolvable:$true] %s144
          %150 = dma.hbm_to_vmem [thread:$0]  %s2, 256, %s145, [#allocation6], 128, 128, 8
        $region20: #{tpu_custom_call.1} parent=11 // pred_fallthru
          _
      $region12: #{tpu_custom_call.1} parent=5 // pred_fallthru
        _
      %p151 = scmp.lt.s32.totalorder %s16, 2
      // Predicated region
      $region21: #{tpu_custom_call.1} parent=5 // pred_check
        %p152 = pneg %p151
      $region22: #{tpu_custom_call.1} parent=5 // pred_check_branch
        %154 = sbr.rel (%p152) target = $region24
      $region23: #{tpu_custom_call.1} parent=5 // pred_region
        // Predicated region
        $region25: #{tpu_custom_call.1} parent=23 // pred_check
          %p155 = pneg %p36
        $region26: #{tpu_custom_call.1} parent=23 // pred_check_branch
          %157 = sbr.rel (%p155) target = $region28
        $region27: #{tpu_custom_call.1} parent=23 // pred_region
          %s158 = sand.u32 %s26, 1
          %s159 = scalar_lea.sflag [#allocation3], %s158
          %s160 = sand.u32 %s26, 1
          %s161 = smul.addr %s160, 16
          %s162 = scalar_lea.vmem [#allocation2], %s161
          %s164 = ssub.s32 256, 256
          %165 = vsyncadd %s159, %s164
          %s166 = smul.addr %s16, 2
          %s167 = smul.addr %s166, 128
          %s168 = scalar_lea.hbm %s0, %s167
          %s169 = sshll.u32 %s162, 4
          %s170 = int_to_ptr.vmem [resolvable:$true] %s169
          %175 = dma.hbm_to_vmem [thread:$0]  %s168, 256, %s170, %s159, 128, 128, 8
        $region28: #{tpu_custom_call.1} parent=23 // pred_fallthru
          _
      $region24: #{tpu_custom_call.1} parent=5 // pred_fallthru
        _
      %p176 = scmp.le.s32.totalorder 1, %s16
      %p177 = scmp.lt.s32.totalorder %s16, 3
      %p178 = pnand %p176, %p177
      %p179 = pneg %p178
      // Predicated region
      $region29: #{tpu_custom_call.1} parent=5 // pred_check
        _
      $region30: #{tpu_custom_call.1} parent=5 // pred_check_branch
        %181 = sbr.rel (%p178) target = $region32
      $region31: #{tpu_custom_call.1} parent=5 // pred_region
        %s182 = ssub.s32 %s16, 1
        %s183 = sand.u32 %s29, 1
        %s184 = scalar_lea.sflag [#allocation3], %s183
        %s185 = sand.u32 %s29, 1
        %s186 = smul.addr %s185, 16
        %s187 = scalar_lea.vmem [#allocation2], %s186
        // Predicated region
        $region33: #{tpu_custom_call.1} parent=31 // pred_check
          %p188 = pneg %p42
        $region34: #{tpu_custom_call.1} parent=31 // pred_check_branch
          %190 = sbr.rel (%p188) target = $region36
        $region35: #{tpu_custom_call.1} parent=31 // pred_region
          %191 = dma.done %s184, 256
        $region36: #{tpu_custom_call.1} parent=31 // pred_fallthru
          _
        // Predicated region
        $region37: #{tpu_custom_call.1} parent=31 // pred_check
          %p192 = pneg %p63
        $region38: #{tpu_custom_call.1} parent=31 // pred_check_branch
          %194 = sbr.rel (%p192) target = $region40
        $region39: #{tpu_custom_call.1} parent=31 // pred_region
          %195 = dma.done [#allocation6], 256
        $region40: #{tpu_custom_call.1} parent=31 // pred_fallthru
          _
        // Predicated region
        $region41: #{tpu_custom_call.1} parent=31 // pred_check
          %p196 = pneg %p84
        $region42: #{tpu_custom_call.1} parent=31 // pred_check_branch
          %198 = sbr.rel (%p196) target = $region44
        $region43: #{tpu_custom_call.1} parent=31 // pred_region
          %199 = dma.done [#allocation6], 256
        $region44: #{tpu_custom_call.1} parent=31 // pred_fallthru
          _
        %s200 = sand.u32 %s29, 1
        %s201 = scalar_lea.sflag [#allocation3], %s200
        %s202 = sand.u32 %s29, 1
        %s203 = smul.addr %s202, 16
        %s204 = scalar_lea.vmem [#allocation2], %s203
        %p205 = pneg %p42
        %p206 = pneg %p39
        %p207 = pneg %p63
        %p208 = pneg %p60
        %p209 = pneg %p84
        %p210 = pneg %p81
        %p211 = pneg %p110
        %p212 = pneg %p107
        %s213 = sand.u32 %s97, 1
        %s214 = scalar_lea.sflag [#allocation4], %s213
        %s215 = sand.u32 %s97, 1
        %s216 = smul.addr %s215, 16
        %s217 = scalar_lea.vmem [#allocation8], %s216
        %v218 = vld [vmem:[%s187] sm:$0xff]
        %v219 = vld [vmem:[%s187 + $0x8] sm:$0xff]
        %220 = vadd.xlane.f32.xlu0 %v218
        %v221 = vpop.xlane.xlu0 %220
        %222 = vadd.xlane.f32.xlu0 %v219
        %v223 = vpop.xlane.xlu0 %222
        %v224 = vmul.f32 %v221, 0.0078125
        %v225 = vmul.f32 %v223, 0.0078125
        %v226 = vsub.f32 %v218, %v224
        %v227 = vsub.f32 %v219, %v225
        %v228 = vmul.f32 %v226, %v226
        %v229 = vmul.f32 %v227, %v227
        %230 = vadd.xlane.f32.xlu0 %v228
        %v231 = vpop.xlane.xlu0 %230
        %232 = vadd.xlane.f32.xlu0 %v229
        %v233 = vpop.xlane.xlu0 %232
        %v234 = vmul.f32 %v231, 0.007874016
        %v235 = vmul.f32 %v233, 0.007874016
        %v236 = vrsqrt.pop %v234
        %v237 = vmul.f32 %v234, %v236
        %vm238 = vcmp.eq.f32.partialorder %v234, inf
        %v239 = vsel %vm238, %v234, %v237
        %vm240 = vcmp.eq.f32.partialorder %v234, 0.0
        %v241 = vand.u32 %v234, 2147483648
        %v242 = vsel %vm240, %v241, %v239
        %v243 = vrsqrt.pop %v235
        %v244 = vmul.f32 %v235, %v243
        %vm245 = vcmp.eq.f32.partialorder %v235, inf
        %v246 = vsel %vm245, %v235, %v244
        %vm247 = vcmp.eq.f32.partialorder %v235, 0.0
        %v248 = vand.u32 %v235, 2147483648
        %v249 = vsel %vm247, %v248, %v246
        %v250 = vadd.f32 %v242, 1e-10
        %v251 = vadd.f32 %v249, 1e-10
        %v252 = vrcp.pop %v250
        %v253 = vmul.f32 1.0, %v252
        %v254 = vrcp.pop %v251
        %v255 = vmul.f32 1.0, %v254
        %v256 = vld [vmem:[#allocation5] sm:$0xff]
        %v257 = vld [vmem:[#allocation5 + $0x8] sm:$0xff]
        %v258 = vmul.f32 %v256, %v253
        %v259 = vmul.f32 %v257, %v255
        %v260 = vld [vmem:[#allocation7] sm:$0xff]
        %v261 = vld [vmem:[#allocation7 + $0x8] sm:$0xff]
        %v262 = vmul.f32 %v226, %v258
        %v263 = vmul.f32 %v227, %v259
        %v264 = vadd.f32 %v262, %v260
        %v265 = vadd.f32 %v263, %v261
        %266 = vst [vmem:[%s217] sm:$0xff] %v264
        %267 = vst [vmem:[%s217 + $0x8] sm:$0xff] %v265
        %s268 = sand.u32 %s97, 1
        %s269 = scalar_lea.sflag [#allocation4], %s268
        %s270 = sand.u32 %s97, 1
        %s271 = smul.addr %s270, 16
        %s272 = scalar_lea.vmem [#allocation8], %s271
        // Predicated region
        $region45: #{tpu_custom_call.1} parent=31 // pred_check
          %p273 = pneg %p107
        $region46: #{tpu_custom_call.1} parent=31 // pred_check_branch
          %275 = sbr.rel (%p273) target = $region48
        $region47: #{tpu_custom_call.1} parent=31 // pred_region
          %s277 = ssub.s32 256, 256
          %278 = vsyncadd %s269, %s277
          %s279 = smul.addr %s21, 2
          %s280 = smul.addr %s279, 128
          %s281 = scalar_lea.hbm %s3, %s280
          %s282 = sshll.u32 %s272, 4
          %s283 = int_to_ptr.vmem [resolvable:$true] %s282
          %288 = dma.vmem_to_hbm [thread:$0]  %s283, 256, %s281, %s269, 128, 128, 8
        $region48: #{tpu_custom_call.1} parent=31 // pred_fallthru
          _
      $region32: #{tpu_custom_call.1} parent=5 // pred_fallthru
        _
      %p289 = scmp.le.s32.totalorder 2, %s16
      // Predicated region
      $region49: #{tpu_custom_call.1} parent=5 // pred_check
        %p290 = pneg %p289
      $region50: #{tpu_custom_call.1} parent=5 // pred_check_branch
        %292 = sbr.rel (%p290) target = $region52
      $region51: #{tpu_custom_call.1} parent=5 // pred_region
        %s293 = ssub.s32 %s16, 2
        // Predicated region
        $region53: #{tpu_custom_call.1} parent=51 // pred_check
          %p294 = pneg %p113
        $region54: #{tpu_custom_call.1} parent=51 // pred_check_branch
          %296 = sbr.rel (%p294) target = $region56
        $region55: #{tpu_custom_call.1} parent=51 // pred_region
          %s297 = sand.u32 %s98, 1
          %s298 = scalar_lea.sflag [#allocation4], %s297
          %s299 = sand.u32 %s98, 1
          %s300 = smul.addr %s299, 16
          %s301 = scalar_lea.vmem [#allocation8], %s300
          %302 = dma.done %s298, 256
        $region56: #{tpu_custom_call.1} parent=51 // pred_fallthru
          _
      $region52: #{tpu_custom_call.1} parent=5 // pred_fallthru
        _
    $region6: #{tpu_custom_call.1} parent=1 // loop_footer
      %s20 = sadd.s32 1, %s16
    $region7: #{tpu_custom_call.1} parent=1 // loop_footer_branch
      %15 = sbr.rel target = $region3
    $region8: #{tpu_custom_call.1} parent=1 // loop_exit
      _
    %303 = vsyncpa [#allocation3], 1
    %s304 = scalar_lea.sflag [#allocation3], 1
    %305 = vsyncpa %s304, 1
    %306 = vsyncpa [#allocation6], 1
    %307 = vsyncpa [#allocation4], 1
    %s308 = scalar_lea.sflag [#allocation4], 1
    %309 = vsyncpa %s308, 1

</llo_original>
